<compile_context>
chip_gen: v7x
topology: tpu7x:2x2x1
jax: 0.10.0
libtpu: 0.0.40
codegen_flags: <defaults>
</compile_context>

<pallas_src>
import functools

import jax
import jax.numpy as jnp
from jax.experimental import pallas as pl
from jax.experimental.pallas import tpu as pltpu


def _round_up(a, b):
    return (a + b - 1) // b * b


def _pick_lane_tile(dim, cap):
    """Lane-aligned tile: multiple of 128, and multiple of 256 when >128
    (2x256 MXU on v6e/v7x), capped at `cap` (cap must be a 256 multiple)."""
    t = _round_up(dim, 128)
    if t > 128:
        t = _round_up(t, 256)
    return min(t, cap)


def _linear_kernel(x_ref, w_ref, b_ref, o_ref):
    """One (tm, tn) output tile; K is the innermost (arbitrary) grid axis.

    x_ref: (tm, tk)   w_ref: (tk, tn)  [pre-transposed weight W^T]
    b_ref: (1, tn)    o_ref: (tm, tn) f32 -- resident across the K axis.
    """
    k = pl.program_id(2)

    part = jnp.dot(x_ref[...], w_ref[...], preferred_element_type=jnp.float32)

    @pl.when(k == 0)
    def _():
        o_ref[...] = part          # direct write: no zero-init pass

    @pl.when(k > 0)
    def _():
        o_ref[...] += part         # accumulate directly into the output tile

    @pl.when(k == pl.num_programs(2) - 1)
    def _():
        o_ref[...] += b_ref[...]   # bias epilogue on the last K step only


@functools.partial(jax.jit, static_argnames=("out_dim", "tn", "tk", "tm_max"))
def _pallas_linear(x, w_t, b2d, *, out_dim, tn, tk, tm_max=512):
    """x: (B, In) -> (B, out_dim). w_t: (In_pad, Out_pad) pre-padded/transposed,
    b2d: (1, Out_pad)."""
    B, In = x.shape
    In_pad, Out_pad = w_t.shape

    tm = min(_round_up(B, 8), tm_max)
    B_pad = _round_up(B, tm)

    # v7x megacore: if the whole MxN output is a single block, split M so both
    # TensorCores get work (harmless on single-TC v5e/v6e).
    if (B_pad // tm) * (Out_pad // tn) < 2 and tm > 8:
        tm = _round_up((tm + 1) // 2, 8)
        B_pad = _round_up(B, tm)

    # Per-call padding only touches the activation (weight pad/transpose was
    # hoisted to init). Zero rows/cols contribute nothing to the contraction.
    x_p = x.astype(w_t.dtype)
    if B_pad != B or In_pad != In:
        x_p = jnp.pad(x_p, ((0, B_pad - B), (0, In_pad - In)))

    grid = (B_pad // tm, Out_pad // tn, In_pad // tk)

    out = pl.pallas_call(
        _linear_kernel,
        out_shape=jax.ShapeDtypeStruct((B_pad, Out_pad), jnp.float32),
        grid=grid,
        in_specs=[
            pl.BlockSpec((tm, tk), lambda i, j, k: (i, k)),   # x tile
            pl.BlockSpec((tk, tn), lambda i, j, k: (k, j)),   # W^T tile (NN layout)
            pl.BlockSpec((1, tn), lambda i, j, k: (0, j)),    # bias tile
        ],
        out_specs=pl.BlockSpec((tm, tn), lambda i, j, k: (i, j)),
        compiler_params=pltpu.CompilerParams(
            dimension_semantics=("parallel", "parallel", "arbitrary"),
            vmem_limit_bytes=48 * 1024 * 1024,
        ),
        cost_estimate=pl.CostEstimate(
            flops=2 * B_pad * In_pad * Out_pad,
            transcendentals=0,
            bytes_accessed=int(
                x_p.dtype.itemsize * (B_pad * In_pad + In_pad * Out_pad)
                + 4 * (Out_pad + B_pad * Out_pad)
            ),
        ),
    )(x_p, w_t, b2d)

    return out[:B, :out_dim]


class PolyRegressPallas:
    """Pallas-TPU forward of PolyRegress (nn.Linear): pred = x @ W^T + b."""

    def __init__(self, weight, bias, *, tm_max=512, tn_max=512, tk_max=1024,
                 cast_to_bf16=False):
        weight = jnp.asarray(weight, jnp.float32)   # (Out, In)
        bias = jnp.asarray(bias, jnp.float32)       # (Out,)
        self.out_dim, self.in_dim = weight.shape
        self.tm_max = tm_max
        self.tn = _pick_lane_tile(self.out_dim, tn_max)
        self.tk = _pick_lane_tile(self.in_dim, tk_max)
        out_pad = _round_up(self.out_dim, self.tn)
        in_pad = _round_up(self.in_dim, self.tk)

        # Hoisted param prep (done exactly once): pad and pre-transpose so the
        # kernel sees a contiguous (In_pad, Out_pad) weight and a lane-dense
        # (1, Out_pad) bias.
        w_t = jnp.pad(
            weight, ((0, out_pad - self.out_dim), (0, in_pad - self.in_dim))
        ).T
        if cast_to_bf16:
            w_t = w_t.astype(jnp.bfloat16)
        self.w_t = w_t                                            # (In_pad, Out_pad)
        self.b2d = jnp.pad(bias, (0, out_pad - self.out_dim)).reshape(1, out_pad)

        # Originals kept for the tiny-problem XLA fast path.
        self._weight = weight
        self._bias = bias

    def __call__(self, x, *, force_pallas=False):
        x = jnp.asarray(x, jnp.float32)
        B = x.shape[0]
        # Tiny problems are pure launch overhead for a Pallas call -> fused XLA.
        if not force_pallas and (B * self.in_dim * self.out_dim) < (1 << 18):
            return x @ self._weight.T + self._bias
        return _pallas_linear(
            x, self.w_t, self.b2d,
            out_dim=self.out_dim, tn=self.tn, tk=self.tk, tm_max=self.tm_max,
        )


if __name__ == "__main__":
    key = jax.random.PRNGKey(0)
    k1, k2, k3, k4, k5, k6 = jax.random.split(key, 6)

    # Small shape implied by the module: nn.Linear(input_size=32, output_size=8),
    # batch=8 (same semantics as PolyRegress.forward).
    batch, input_size, output_size = 8, 32, 8
    x = jax.random.normal(k1, (batch, input_size), dtype=jnp.float32)
    bound = 1.0 / (input_size ** 0.5)
    weight = jax.random.uniform(
        k2, (output_size, input_size), minval=-bound, maxval=bound, dtype=jnp.float32
    )
    bias = jax.random.uniform(
        k3, (output_size,), minval=-bound, maxval=bound, dtype=jnp.float32
    )

    model = PolyRegressPallas(weight, bias)
    ref = x @ weight.T + bias

    # Force the Pallas path so the kernel actually runs at the module's shape.
    out = model(x, force_pallas=True)
    jax.block_until_ready(out)
    assert out.shape == (batch, output_size)
    assert jnp.allclose(out, ref, atol=1e-5, rtol=1e-5), "small-shape mismatch"

    # Default call: tiny size takes the XLA fast path (same result).
    out_fast = model(x)
    jax.block_until_ready(out_fast)
    assert jnp.allclose(out_fast, ref, atol=1e-5, rtol=1e-5), "fast-path mismatch"

    # Larger check exercising K-tiling (grid K = 3) and the megacore M split.
    B2, In2, Out2 = 256, 1536, 512
    x2 = jax.random.normal(k4, (B2, In2), dtype=jnp.float32)
    bound2 = 1.0 / (In2 ** 0.5)
    w2 = jax.random.uniform(k5, (Out2, In2), minval=-bound2, maxval=bound2,
                            dtype=jnp.float32)
    b2 = jax.random.uniform(k6, (Out2,), minval=-bound2, maxval=bound2,
                            dtype=jnp.float32)
    model2 = PolyRegressPallas(w2, b2, tk_max=512)   # tk=512 -> K grid of 3
    out2 = model2(x2)
    jax.block_until_ready(out2)
    ref2 = x2 @ w2.T + b2
    assert out2.shape == (B2, Out2)
    assert jnp.allclose(out2, ref2, atol=1e-4, rtol=1e-4), "large-shape mismatch"

    print("KERNEL_OK")
</pallas_src>

<mosaic_0001>
module attributes {stable_mosaic.version = 11 : i64} {
  func.func @_linear_kernel(%arg0: i32, %arg1: i32, %arg2: i32, %arg3: memref<8x128xf32, #tpu.memory_space<vmem>>, %arg4: memref<128x128xf32, #tpu.memory_space<vmem>>, %arg5: memref<1x128xf32, #tpu.memory_space<vmem>>, %arg6: memref<8x128xf32, #tpu.memory_space<vmem>>) attributes {dimension_semantics = [#tpu.dimension_semantics<parallel>, #tpu.dimension_semantics<parallel>, #tpu.dimension_semantics<arbitrary>], iteration_bounds = array<i64: 1, 1, 1>, scalar_prefetch = 0 : i64, scratch_operands = 0 : i64, tpu.core_type = #tpu.core_type<tc>, window_params = [{transform_indices = @transform_0, window_bounds = array<i64: 8, 128>}, {transform_indices = @transform_1, window_bounds = array<i64: 128, 128>}, {transform_indices = @transform_2, window_bounds = array<i64: 1, 128>}, {transform_indices = @transform_3, window_bounds = array<i64: 8, 128>}]} {
    %c0 = arith.constant 0 : index
    %c0_0 = arith.constant 0 : index
    %0 = vector.load %arg3[%c0, %c0_0] : memref<8x128xf32, #tpu.memory_space<vmem>>, vector<8x128xf32>
    %c0_1 = arith.constant 0 : index
    %c0_2 = arith.constant 0 : index
    %1 = vector.load %arg4[%c0_1, %c0_2] : memref<128x128xf32, #tpu.memory_space<vmem>>, vector<128x128xf32>
    %cst = arith.constant dense<0.000000e+00> : vector<8x128xf32>
    %2 = tpu.matmul %0, %1, %cst {dimension_numbers = #tpu.dot_dimension_numbers<[1], [0], [0], [1], [0, 0, 1, 1], [], []>} : vector<8x128xf32>, vector<128x128xf32>, vector<8x128xf32> -> vector<8x128xf32>
    %c0_i32 = arith.constant 0 : i32
    %3 = arith.cmpi eq, %arg2, %c0_i32 : i32
    %4 = arith.extui %3 : i1 to i32
    %c0_i32_3 = arith.constant 0 : i32
    %5 = arith.cmpi ne, %4, %c0_i32_3 : i32
    scf.if %5 {
      %c0_8 = arith.constant 0 : index
      %c0_9 = arith.constant 0 : index
      %12 = vector.load %arg6[%c0_8, %c0_9] : memref<8x128xf32, #tpu.memory_space<vmem>>, vector<8x128xf32>
      tpu.vector_store %arg6[%c0_8, %c0_9], %2 {strides = array<i32>} : memref<8x128xf32, #tpu.memory_space<vmem>>, vector<8x128xf32>,
    } else {
    }
    %c0_i32_4 = arith.constant 0 : i32
    %6 = arith.cmpi sgt, %arg2, %c0_i32_4 : i32
    %7 = arith.extui %6 : i1 to i32
    %c0_i32_5 = arith.constant 0 : i32
    %8 = arith.cmpi ne, %7, %c0_i32_5 : i32
    scf.if %8 {
      %c0_8 = arith.constant 0 : index
      %c0_9 = arith.constant 0 : index
      %12 = vector.load %arg6[%c0_8, %c0_9] : memref<8x128xf32, #tpu.memory_space<vmem>>, vector<8x128xf32>
      %13 = arith.addf %12, %2 : vector<8x128xf32>
      %c0_10 = arith.constant 0 : index
      %c0_11 = arith.constant 0 : index
      %14 = vector.load %arg6[%c0_10, %c0_11] : memref<8x128xf32, #tpu.memory_space<vmem>>, vector<8x128xf32>
      tpu.vector_store %arg6[%c0_10, %c0_11], %13 {strides = array<i32>} : memref<8x128xf32, #tpu.memory_space<vmem>>, vector<8x128xf32>,
    } else {
    }
    %c0_i32_6 = arith.constant 0 : i32
    %9 = arith.cmpi eq, %arg2, %c0_i32_6 : i32
    %10 = arith.extui %9 : i1 to i32
    %c0_i32_7 = arith.constant 0 : i32
    %11 = arith.cmpi ne, %10, %c0_i32_7 : i32
    scf.if %11 {
      %c0_8 = arith.constant 0 : index
      %c0_9 = arith.constant 0 : index
      %12 = vector.load %arg6[%c0_8, %c0_9] : memref<8x128xf32, #tpu.memory_space<vmem>>, vector<8x128xf32>
      %c0_10 = arith.constant 0 : index
      %c0_11 = arith.constant 0 : index
      %13 = vector.load %arg5[%c0_10, %c0_11] : memref<1x128xf32, #tpu.memory_space<vmem>>, vector<1x128xf32>
      %14 = vector.broadcast %13 : vector<1x128xf32> to vector<8x128xf32>
      %15 = arith.addf %12, %14 : vector<8x128xf32>
      %c0_12 = arith.constant 0 : index
      %c0_13 = arith.constant 0 : index
      %16 = vector.load %arg6[%c0_12, %c0_13] : memref<8x128xf32, #tpu.memory_space<vmem>>, vector<8x128xf32>
      tpu.vector_store %arg6[%c0_12, %c0_13], %15 {strides = array<i32>} : memref<8x128xf32, #tpu.memory_space<vmem>>, vector<8x128xf32>,
    } else {
    }
    return
  }
  func.func @transform_0(%arg0: i32, %arg1: i32, %arg2: i32) -> (i32, i32) {
    %c0_i32 = arith.constant 0 : i32
    return %arg0, %arg2 : i32, i32
  }
  func.func @transform_1(%arg0: i32, %arg1: i32, %arg2: i32) -> (i32, i32) {
    %c0_i32 = arith.constant 0 : i32
    return %arg2, %arg1 : i32, i32
  }
  func.func @transform_2(%arg0: i32, %arg1: i32, %arg2: i32) -> (i32, i32) {
    %c0_i32 = arith.constant 0 : i32
    %c0_i32_0 = arith.constant 0 : i32
    return %c0_i32, %arg1 : i32, i32
  }
  func.func @transform_3(%arg0: i32, %arg1: i32, %arg2: i32) -> (i32, i32) {
    %c0_i32 = arith.constant 0 : i32
    return %arg0, %arg1 : i32, i32
  }
}

</mosaic_0001>

<llo_original>
// kernel: _pallas_linear.1
$region0: #{_pallas_linear.1}
  #allocation0 [shape = 'u32[]', space=smem, size = 0x4, offset = 0x4, fixed_abs, tag = 'smem constant byte address 0x4 - core index']
  #allocation1 [shape = 'u32[144,128]{1,0:T(1,128)}', space=vmem, size = 0x12000, scoped, tag = 'internal scratch']
  %s0 = inlined_call_operand.vmem [shape: f32[8,128], index: 0, kind: input, shape index: {}]
  %s1 = inlined_call_operand.hbm [shape: f32[128,128], index: 1, kind: input, shape index: {}]
  %s2 = inlined_call_operand.vmem [shape: f32[1,128], index: 2, kind: input, shape index: {}]
  %s3 = inlined_call_operand.hbm [shape: f32[8,128], index: 3, kind: output, shape index: {}]
  %s4 = sld [smem:[#allocation0]]
  $region38: #{_pallas_linear.1} parent=0
    _
  %s6 = ssub.s32 1, %s4
  %s7 = scalar_select 0, %s6, %s4
  $region1: #{_pallas_linear.1} parent=0
    #allocation2 [shape = 'u8[65536]{0}', space=vmem, size = 0x10000, scoped, tag = 'input window, operand 1, single buffered']
    #allocation3 [shape = 's32[1]{0}', space=sflag, size = 0x4, scoped, tag = 'scoped memory for _pallas_linear.1']
    #allocation4 [shape = 's32[1]{0}', space=sflag, size = 0x4, scoped, tag = 'scoped memory for _pallas_linear.1']
    #allocation5 [shape = 'u8[4096]{0}', space=vmem, size = 0x1000, scoped, tag = 'output window, operand 0, single buffered']
    %8 = vsyncpa [#allocation3], 0
    %9 = vsyncpa [#allocation4], 0
    // Predicated region
    $region2: #{_pallas_linear.1} parent=1 // pred_check
      _
    $region3: #{_pallas_linear.1} parent=1 // pred_check_branch
      %11 = sbr.rel (0) target = $region5
    $region4: #{_pallas_linear.1} parent=1 // pred_region
      _
    $region5: #{_pallas_linear.1} parent=1 // pred_fallthru
      _
    // Predicated region
    $region6: #{_pallas_linear.1} parent=1 // pred_check
      _
    $region7: #{_pallas_linear.1} parent=1 // pred_check_branch
      %13 = sbr.rel (0) target = $region9
    $region8: #{_pallas_linear.1} parent=1 // pred_region
      %s15 = ssub.s32 2048, 2048
      %16 = vsyncadd [#allocation3], %s15
      %s17 = sshll.u32 [#allocation2], 4
      %s18 = int_to_ptr.vmem [resolvable:$true] %s17
      %23 = dma.hbm_to_vmem [thread:$0]  %s1, 2048, %s18, [#allocation3], 128, 128, 8
    $region9: #{_pallas_linear.1} parent=1 // pred_fallthru
      _
    // Predicated region
    $region10: #{_pallas_linear.1} parent=1 // pred_check
      _
    $region11: #{_pallas_linear.1} parent=1 // pred_check_branch
      %25 = sbr.rel (0) target = $region13
    $region12: #{_pallas_linear.1} parent=1 // pred_region
      _
    $region13: #{_pallas_linear.1} parent=1 // pred_fallthru
      _
    // Predicated region
    $region14: #{_pallas_linear.1} parent=1 // pred_check
      _
    $region15: #{_pallas_linear.1} parent=1 // pred_check_branch
      %27 = sbr.rel (0) target = $region17
    $region16: #{_pallas_linear.1} parent=1 // pred_region
      %28 = dma.done [#allocation3], 2048
    $region17: #{_pallas_linear.1} parent=1 // pred_fallthru
      _
    %v29 = vld [vmem:[%s0] sm:$0xff]
    %v30 = vld [vmem:[#allocation2] sm:$0xff]
    %v31 = vld [vmem:[#allocation2 + $0x8] sm:$0xff]
    %v32 = vld [vmem:[#allocation2 + $0x10] sm:$0xff]
    %v33 = vld [vmem:[#allocation2 + $0x18] sm:$0xff]
    %v34 = vld [vmem:[#allocation2 + $0x20] sm:$0xff]
    %v35 = vld [vmem:[#allocation2 + $0x28] sm:$0xff]
    %v36 = vld [vmem:[#allocation2 + $0x30] sm:$0xff]
    %v37 = vld [vmem:[#allocation2 + $0x38] sm:$0xff]
    %v38 = vld [vmem:[#allocation2 + $0x40] sm:$0xff]
    %v39 = vld [vmem:[#allocation2 + $0x48] sm:$0xff]
    %v40 = vld [vmem:[#allocation2 + $0x50] sm:$0xff]
    %v41 = vld [vmem:[#allocation2 + $0x58] sm:$0xff]
    %v42 = vld [vmem:[#allocation2 + $0x60] sm:$0xff]
    %v43 = vld [vmem:[#allocation2 + $0x68] sm:$0xff]
    %v44 = vld [vmem:[#allocation2 + $0x70] sm:$0xff]
    %v45 = vld [vmem:[#allocation2 + $0x78] sm:$0xff]
    %46 = vmatprep.subr.mxu0 0.0
    %47 = vmatpush1.msra.mxu0 %v30
    %48 = vmatprep.subr.mxu0 0.0
    %49 = vmatpush1.msra.mxu0 %v31
    %50 = vmatprep.subr.mxu0 0.0
    %51 = vmatpush1.msra.mxu0 %v32
    %52 = vmatprep.subr.mxu0 0.0
    %53 = vmatpush1.msra.mxu0 %v33
    %54 = vmatprep.subr.mxu0 0.0
    %55 = vmatpush1.msra.mxu0 %v34
    %56 = vmatprep.subr.mxu0 0.0
    %57 = vmatpush1.msra.mxu0 %v35
    %58 = vmatprep.subr.mxu0 0.0
    %59 = vmatpush1.msra.mxu0 %v36
    %60 = vmatprep.subr.mxu0 0.0
    %61 = vmatpush1.msra.mxu0 %v37
    %62 = vmatprep.subr.mxu0 0.0
    %63 = vmatpush1.msra.mxu0 %v38
    %64 = vmatprep.subr.mxu0 0.0
    %65 = vmatpush1.msra.mxu0 %v39
    %66 = vmatprep.subr.mxu0 0.0
    %67 = vmatpush1.msra.mxu0 %v40
    %68 = vmatprep.subr.mxu0 0.0
    %69 = vmatpush1.msra.mxu0 %v41
    %70 = vmatprep.subr.mxu0 0.0
    %71 = vmatpush1.msra.mxu0 %v42
    %72 = vmatprep.subr.mxu0 0.0
    %73 = vmatpush1.msra.mxu0 %v43
    %74 = vmatprep.subr.mxu0 0.0
    %75 = vmatpush1.msra.mxu0 %v44
    %76 = vmatprep.subr.mxu0 0.0
    %77 = vmatpush1.msra.mxu0 %v45
    %78 = vmatprep.subr.mxu0 0.0
    %79 = vmatpush1.msra.mxu0 0.0
    %80 = vmatprep.subr.mxu0 0.0
    %81 = vmatpush1.msra.mxu0 0.0
    %82 = vmatprep.subr.mxu0 0.0
    %83 = vmatpush1.msra.mxu0 0.0
    %84 = vmatprep.subr.mxu0 0.0
    %85 = vmatpush1.msra.mxu0 0.0
    %86 = vmatprep.subr.mxu0 0.0
    %87 = vmatpush1.msra.mxu0 0.0
    %88 = vmatprep.subr.mxu0 0.0
    %89 = vmatpush1.msra.mxu0 0.0
    %90 = vmatprep.subr.mxu0 0.0
    %91 = vmatpush1.msra.mxu0 0.0
    %92 = vmatprep.subr.mxu0 0.0
    %93 = vmatpush1.msra.mxu0 0.0
    %94 = vmatprep.subr.mxu0 0.0
    %95 = vmatpush1.msra.mxu0 0.0
    %96 = vmatprep.subr.mxu0 0.0
    %97 = vmatpush1.msra.mxu0 0.0
    %98 = vmatprep.subr.mxu0 0.0
    %99 = vmatpush1.msra.mxu0 0.0
    %100 = vmatprep.subr.mxu0 0.0
    %101 = vmatpush1.msra.mxu0 0.0
    %102 = vmatprep.subr.mxu0 0.0
    %103 = vmatpush1.msra.mxu0 0.0
    %104 = vmatprep.subr.mxu0 0.0
    %105 = vmatpush1.msra.mxu0 0.0
    %106 = vmatprep.subr.mxu0 0.0
    %107 = vmatpush1.msra.mxu0 0.0
    %108 = vmatprep.subr.mxu0 0.0
    %109 = vmatpush1.msra.mxu0 0.0
    %110 = vmatprep.mubr.f32.mxu0 0.0
    %111 = vmatmul.mubr.f32.gmra.mrb[0].mxu0 %v29
    %v112 = vpop.f32.mrb[0].mxu0
    %v113 = vadd.f32 0.0, %v112
    %v114 = vpop.f32.mrb[0].mxu0
    %115 = vdwg.mxu0
    %p116 = scmp.eq.s32.totalorder 0, 0
    // Predicated region
    $region18: #{_pallas_linear.1} parent=1 // pred_check
      %p117 = pneg %p116
    $region19: #{_pallas_linear.1} parent=1 // pred_check_branch
      %119 = sbr.rel (%p117) target = $region21
    $region20: #{_pallas_linear.1} parent=1 // pred_region
      %120 = vst [vmem:[#allocation5] sm:$0xff] %v113
    $region21: #{_pallas_linear.1} parent=1 // pred_fallthru
      _
    %p121 = scmp.gt.s32.totalorder 0, 0
    // Predicated region
    $region22: #{_pallas_linear.1} parent=1 // pred_check
      %p122 = pneg %p121
    $region23: #{_pallas_linear.1} parent=1 // pred_check_branch
      %124 = sbr.rel (%p122) target = $region25
    $region24: #{_pallas_linear.1} parent=1 // pred_region
      %v125 = vld [vmem:[#allocation5] sm:$0xff]
      %v126 = vadd.f32 %v125, %v113
      %127 = vst [vmem:[#allocation5] sm:$0xff] %v126
    $region25: #{_pallas_linear.1} parent=1 // pred_fallthru
      _
    // Predicated region
    $region26: #{_pallas_linear.1} parent=1 // pred_check
      %p128 = pneg %p116
    $region27: #{_pallas_linear.1} parent=1 // pred_check_branch
      %130 = sbr.rel (%p128) target = $region29
    $region28: #{_pallas_linear.1} parent=1 // pred_region
      %v131 = vld [vmem:[#allocation5] sm:$0xff]
      %v132 = vld [vmem:[%s2] sm:$0x1]
      %v134 = vlaneseq
      %v135 = vshrl.u32 %v134, 7
      %v136 = vsub.s32 0, %v135
      %v137 = vrot.slane %v132, %v136
      %v139 = vadd.f32 %v131, %v137
      %140 = vst [vmem:[#allocation5] sm:$0xff] %v139
    $region29: #{_pallas_linear.1} parent=1 // pred_fallthru
      _
    // Predicated region
    $region30: #{_pallas_linear.1} parent=1 // pred_check
      _
    $region31: #{_pallas_linear.1} parent=1 // pred_check_branch
      %142 = sbr.rel (0) target = $region33
    $region32: #{_pallas_linear.1} parent=1 // pred_region
      %s144 = ssub.s32 128, 128
      %145 = vsyncadd [#allocation4], %s144
      %s147 = sshll.u32 [#allocation5], 4
      %s148 = int_to_ptr.vmem [resolvable:$true] %s147
      %150 = dma.vmem_to_hbm [thread:$0]  %s148, 128, %s3, [#allocation4]
    $region33: #{_pallas_linear.1} parent=1 // pred_fallthru
      _
    // Predicated region
    $region34: #{_pallas_linear.1} parent=1 // pred_check
      _
    $region35: #{_pallas_linear.1} parent=1 // pred_check_branch
      %152 = sbr.rel (0) target = $region37
    $region36: #{_pallas_linear.1} parent=1 // pred_region
      %153 = dma.done [#allocation4], 128
    $region37: #{_pallas_linear.1} parent=1 // pred_fallthru
      _
    %154 = vsyncpa [#allocation3], 1
    %155 = vsyncpa [#allocation4], 1

</llo_original>
